<compile_context>
chip_gen: v6e
topology: v6e:2x2x1
jax: 0.10.0
libtpu: 0.0.40
codegen_flags: <defaults>
</compile_context>

<pallas_src>
import functools

import jax
import jax.numpy as jnp
from jax.experimental import pallas as pl
from jax.experimental.pallas import tpu as pltpu


def _sigmoid(z):
    # Exact sigmoid via a single EUP op (tanh) instead of exp + divide.
    return 0.5 * jnp.tanh(0.5 * z) + 0.5


def _lstm_kernel(gx_ref, whh_ref, out_ref, h_sc, c_sc):
    """One grid step == one chunk of `t_chunk` LSTM time steps.

    gx_ref : (B, Tt, 4H) f32   precomputed x_t @ W_ih^T + (b_ih + b_hh)
    whh_ref: (H, 4H)     bf16  hidden->gates weights (transposed), resident
    out_ref: (B, Tt, H)        output h_t for this chunk
    h_sc   : (B, H) f32        persistent hidden state scratch
    c_sc   : (B, H) f32        persistent cell state scratch
    Gate order follows PyTorch: [i, f, g, o].
    """
    step = pl.program_id(0)

    @pl.when(step == 0)
    def _():
        h_sc[...] = jnp.zeros_like(h_sc)
        c_sc[...] = jnp.zeros_like(c_sc)

    H = whh_ref.shape[0]
    t_chunk = out_ref.shape[1]

    whh = whh_ref[...]
    h = h_sc[...]
    c = c_sc[...]

    # Statically unrolled recurrence over the chunk (all indices static).
    for t in range(t_chunk):
        gates = gx_ref[:, t, :] + jnp.dot(
            h.astype(whh.dtype), whh, preferred_element_type=jnp.float32)
        i_g = _sigmoid(gates[:, 0 * H:1 * H])
        f_g = _sigmoid(gates[:, 1 * H:2 * H])
        g_g = jnp.tanh(gates[:, 2 * H:3 * H])
        o_g = _sigmoid(gates[:, 3 * H:4 * H])
        c = f_g * c + i_g * g_g
        h = o_g * jnp.tanh(c)
        out_ref[:, t:t + 1, :] = h[:, None, :].astype(out_ref.dtype)

    h_sc[...] = h
    c_sc[...] = c


def _pick_time_chunk(T, cap=32):
    """Largest chunk <= cap keeping block shapes legal (multiple of 8 or == T)."""
    if T <= cap:
        return T
    for c in range(cap, 7, -1):
        if T % c == 0 and c % 8 == 0:
            return c
    return T  # fall back: whole sequence in a single grid step


@functools.partial(jax.jit, static_argnames=("hidden_size",))
def modeling_forward(x_btd, w_ih, w_hh, b_ih, b_hh, *, hidden_size):
    """Pallas equivalent of Modeling.forward: returns LSTM outputs (B, T, H).

    x_btd : (B, T, D) batch_first input (same as the PyTorch module)
    w_ih  : (4H, D), w_hh: (4H, H), b_ih/b_hh: (4H,)  -- PyTorch LSTM shapes
    """
    B, T, D = x_btd.shape
    H = hidden_size
    t_chunk = _pick_time_chunk(T)

    # Hoisted input projection: ONE (B*T, D) x (D, 4H) bf16 MXU matmul with
    # f32 accumulation, bias folded in. Result stays batch-first (B, T, 4H),
    # so there are no full-array transposes anywhere in the wrapper.
    wih_t = jnp.transpose(w_ih, (1, 0)).astype(jnp.bfloat16)          # (D, 4H)
    bias = (b_ih + b_hh).astype(jnp.float32)                          # (4H,)
    gates_x = jnp.einsum(
        "btd,dg->btg",
        x_btd.astype(jnp.bfloat16), wih_t,
        preferred_element_type=jnp.float32,
    ) + bias[None, None, :]                                           # (B, T, 4H)

    whh_t = jnp.transpose(w_hh, (1, 0)).astype(jnp.bfloat16)          # (H, 4H)

    out = pl.pallas_call(
        _lstm_kernel,
        out_shape=jax.ShapeDtypeStruct((B, T, H), jnp.float32),
        grid_spec=pltpu.PrefetchScalarGridSpec(
            num_scalar_prefetch=0,
            grid=(T // t_chunk,),
            in_specs=[
                # per-chunk slice of the precomputed input gates
                pl.BlockSpec((B, t_chunk, 4 * H), lambda s: (0, s, 0)),
                # recurrent weights: whole array, resident across all steps
                pl.BlockSpec((H, 4 * H), lambda s: (0, 0)),
            ],
            out_specs=pl.BlockSpec((B, t_chunk, H), lambda s: (0, s, 0)),
            scratch_shapes=[
                pltpu.VMEM((B, H), jnp.float32),  # h state
                pltpu.VMEM((B, H), jnp.float32),  # c state
            ],
        ),
        compiler_params=pltpu.CompilerParams(
            # recurrence over time: must run sequentially
            dimension_semantics=("arbitrary",),
        ),
    )(gates_x, whh_t)

    return out  # (B, T, H) batch_first — matches nn.LSTM(batch_first=True)


# TODO(synk): n_layers > 1 (stacked LSTM) not implemented; the module's default
# n_layers=1 is what this forward pass reproduces (dropout is inactive there).


def _reference_lstm(x_btd, w_ih, w_hh, b_ih, b_hh, hidden_size):
    """Pure-JAX f32 reference matching torch.nn.LSTM (single layer, batch_first)."""
    B, T, D = x_btd.shape
    H = hidden_size
    x_tbd = jnp.transpose(x_btd, (1, 0, 2)).astype(jnp.float32)
    wih_t = w_ih.T.astype(jnp.float32)
    whh_t = w_hh.T.astype(jnp.float32)
    bias = (b_ih + b_hh).astype(jnp.float32)

    def step(carry, x_t):
        h, c = carry
        gates = x_t @ wih_t + h @ whh_t + bias
        i = jax.nn.sigmoid(gates[:, 0 * H:1 * H])
        f = jax.nn.sigmoid(gates[:, 1 * H:2 * H])
        g = jnp.tanh(gates[:, 2 * H:3 * H])
        o = jax.nn.sigmoid(gates[:, 3 * H:4 * H])
        c = f * c + i * g
        h = o * jnp.tanh(c)
        return (h, c), h

    init = (jnp.zeros((B, H), jnp.float32), jnp.zeros((B, H), jnp.float32))
    _, out = jax.lax.scan(step, init, x_tbd)
    return jnp.transpose(out, (1, 0, 2))


if __name__ == "__main__":
    # Small shapes consistent with the module: batch=2, seq=8, input=32, hidden=32.
    B, T, D, H = 2, 8, 32, 32

    key = jax.random.PRNGKey(0)
    kx, k1, k2, k3, k4 = jax.random.split(key, 5)

    x = jax.random.normal(kx, (B, T, D), dtype=jnp.float32)

    # Deterministic parameter init, PyTorch-style U(-1/sqrt(H), 1/sqrt(H)).
    bound = 1.0 / jnp.sqrt(jnp.float32(H))
    w_ih = jax.random.uniform(k1, (4 * H, D), jnp.float32, -bound, bound)
    w_hh = jax.random.uniform(k2, (4 * H, H), jnp.float32, -bound, bound)
    b_ih = jax.random.uniform(k3, (4 * H,), jnp.float32, -bound, bound)
    b_hh = jax.random.uniform(k4, (4 * H,), jnp.float32, -bound, bound)

    out = modeling_forward(x, w_ih, w_hh, b_ih, b_hh, hidden_size=H)
    out = jax.block_until_ready(out)

    ref = _reference_lstm(x, w_ih, w_hh, b_ih, b_hh, H)
    assert out.shape == (B, T, H)
    # bf16 matmul operands (MXU fast path) vs. f32 reference -> loose tolerance.
    assert jnp.allclose(out, ref, atol=3e-2, rtol=3e-2), float(
        jnp.max(jnp.abs(out - ref)))

    print("KERNEL_OK")
</pallas_src>

<mosaic_0001>
module attributes {stable_mosaic.version = 11 : i64} {
  func.func @_lstm_kernel(%arg0: i32, %arg1: memref<2x8x128xf32, #tpu.memory_space<vmem>>, %arg2: memref<32x128xbf16, #tpu.memory_space<vmem>>, %arg3: memref<2x8x32xf32, #tpu.memory_space<vmem>>, %arg4: memref<2x32xf32, #tpu.memory_space<vmem>>, %arg5: memref<2x32xf32, #tpu.memory_space<vmem>>) attributes {dimension_semantics = [#tpu.dimension_semantics<arbitrary>], iteration_bounds = array<i64: 1>, scalar_prefetch = 0 : i64, scratch_operands = 2 : i64, tpu.core_type = #tpu.core_type<tc>, window_params = [{transform_indices = @transform_0, window_bounds = array<i64: 2, 8, 128>}, {pipeline_mode = #tpu.pipeline_mode<synchronous>, transform_indices = @transform_1, window_bounds = array<i64: 32, 128>}, {transform_indices = @transform_2, window_bounds = array<i64: 2, 8, 32>}]} {
    %c0_i32 = arith.constant 0 : i32
    %0 = arith.cmpi eq, %arg0, %c0_i32 : i32
    %1 = arith.extui %0 : i1 to i32
    %c0_i32_0 = arith.constant 0 : i32
    %2 = arith.cmpi ne, %1, %c0_i32_0 : i32
    scf.if %2 {
      %cst_130 = arith.constant 0.000000e+00 : f32
      %312 = vector.broadcast %cst_130 : f32 to vector<2x32xf32>
      %c0_131 = arith.constant 0 : index
      %c0_132 = arith.constant 0 : index
      %313 = vector.load %arg4[%c0_131, %c0_132] : memref<2x32xf32, #tpu.memory_space<vmem>>, vector<2x32xf32>
      tpu.vector_store %arg4[%c0_131, %c0_132], %312 {strides = array<i32>} : memref<2x32xf32, #tpu.memory_space<vmem>>, vector<2x32xf32>,
      %cst_133 = arith.constant 0.000000e+00 : f32
      %314 = vector.broadcast %cst_133 : f32 to vector<2x32xf32>
      %c0_134 = arith.constant 0 : index
      %c0_135 = arith.constant 0 : index
      %315 = vector.load %arg5[%c0_134, %c0_135] : memref<2x32xf32, #tpu.memory_space<vmem>>, vector<2x32xf32>
      tpu.vector_store %arg5[%c0_134, %c0_135], %314 {strides = array<i32>} : memref<2x32xf32, #tpu.memory_space<vmem>>, vector<2x32xf32>,
    } else {
    }
    %c0 = arith.constant 0 : index
    %c0_1 = arith.constant 0 : index
    %3 = vector.load %arg2[%c0, %c0_1] : memref<32x128xbf16, #tpu.memory_space<vmem>>, vector<32x128xbf16>
    %c0_2 = arith.constant 0 : index
    %c0_3 = arith.constant 0 : index
    %4 = vector.load %arg4[%c0_2, %c0_3] : memref<2x32xf32, #tpu.memory_space<vmem>>, vector<2x32xf32>
    %c0_4 = arith.constant 0 : index
    %c0_5 = arith.constant 0 : index
    %5 = vector.load %arg5[%c0_4, %c0_5] : memref<2x32xf32, #tpu.memory_space<vmem>>, vector<2x32xf32>
    %c0_6 = arith.constant 0 : index
    %c0_7 = arith.constant 0 : index
    %c0_8 = arith.constant 0 : index
    %6 = vector.load %arg1[%c0_6, %c0_7, %c0_8] : memref<2x8x128xf32, #tpu.memory_space<vmem>>, vector<2x1x128xf32>
    %7 = vector.shape_cast %6 : vector<2x1x128xf32> to vector<2x128xf32>
    %8 = arith.truncf %4 : vector<2x32xf32> to vector<2x32xbf16>
    %cst = arith.constant dense<0.000000e+00> : vector<2x128xf32>
    %9 = tpu.matmul %8, %3, %cst {dimension_numbers = #tpu.dot_dimension_numbers<[1], [0], [0], [1], [0, 0, 1, 1], [], []>} : vector<2x32xbf16>, vector<32x128xbf16>, vector<2x128xf32> -> vector<2x128xf32>
    %10 = arith.addf %7, %9 : vector<2x128xf32>
    %11 = vector.extract_strided_slice %10 {offsets = [0, 0], sizes = [2, 32], strides = [1, 1]} : vector<2x128xf32> to vector<2x32xf32>
    %cst_9 = arith.constant 5.000000e-01 : f32
    %12 = vector.broadcast %cst_9 : f32 to vector<2x32xf32>
    %13 = arith.mulf %12, %11 : vector<2x32xf32>
    %14 = math.tanh %13 : vector<2x32xf32>
    %cst_10 = arith.constant 5.000000e-01 : f32
    %15 = vector.broadcast %cst_10 : f32 to vector<2x32xf32>
    %16 = arith.mulf %15, %14 : vector<2x32xf32>
    %cst_11 = arith.constant 5.000000e-01 : f32
    %17 = vector.broadcast %cst_11 : f32 to vector<2x32xf32>
    %18 = arith.addf %16, %17 : vector<2x32xf32>
    %19 = vector.extract_strided_slice %10 {offsets = [0, 32], sizes = [2, 32], strides = [1, 1]} : vector<2x128xf32> to vector<2x32xf32>
    %cst_12 = arith.constant 5.000000e-01 : f32
    %20 = vector.broadcast %cst_12 : f32 to vector<2x32xf32>
    %21 = arith.mulf %20, %19 : vector<2x32xf32>
    %22 = math.tanh %21 : vector<2x32xf32>
    %cst_13 = arith.constant 5.000000e-01 : f32
    %23 = vector.broadcast %cst_13 : f32 to vector<2x32xf32>
    %24 = arith.mulf %23, %22 : vector<2x32xf32>
    %cst_14 = arith.constant 5.000000e-01 : f32
    %25 = vector.broadcast %cst_14 : f32 to vector<2x32xf32>
    %26 = arith.addf %24, %25 : vector<2x32xf32>
    %27 = vector.extract_strided_slice %10 {offsets = [0, 64], sizes = [2, 32], strides = [1, 1]} : vector<2x128xf32> to vector<2x32xf32>
    %28 = math.tanh %27 : vector<2x32xf32>
    %29 = vector.extract_strided_slice %10 {offsets = [0, 96], sizes = [2, 32], strides = [1, 1]} : vector<2x128xf32> to vector<2x32xf32>
    %cst_15 = arith.constant 5.000000e-01 : f32
    %30 = vector.broadcast %cst_15 : f32 to vector<2x32xf32>
    %31 = arith.mulf %30, %29 : vector<2x32xf32>
    %32 = math.tanh %31 : vector<2x32xf32>
    %cst_16 = arith.constant 5.000000e-01 : f32
    %33 = vector.broadcast %cst_16 : f32 to vector<2x32xf32>
    %34 = arith.mulf %33, %32 : vector<2x32xf32>
    %cst_17 = arith.constant 5.000000e-01 : f32
    %35 = vector.broadcast %cst_17 : f32 to vector<2x32xf32>
    %36 = arith.addf %34, %35 : vector<2x32xf32>
    %37 = arith.mulf %26, %5 : vector<2x32xf32>
    %38 = arith.mulf %18, %28 : vector<2x32xf32>
    %39 = arith.addf %37, %38 : vector<2x32xf32>
    %40 = math.tanh %39 : vector<2x32xf32>
    %41 = arith.mulf %36, %40 : vector<2x32xf32>
    %42 = vector.shape_cast %41 : vector<2x32xf32> to vector<2x1x32xf32>
    %c0_18 = arith.constant 0 : index
    %c0_19 = arith.constant 0 : index
    %c0_20 = arith.constant 0 : index
    %43 = vector.load %arg3[%c0_18, %c0_19, %c0_20] : memref<2x8x32xf32, #tpu.memory_space<vmem>>, vector<2x1x32xf32>
    tpu.vector_store %arg3[%c0_18, %c0_19, %c0_20], %42 {strides = array<i32>} : memref<2x8x32xf32, #tpu.memory_space<vmem>>, vector<2x1x32xf32>,
    %c0_21 = arith.constant 0 : index
    %c1 = arith.constant 1 : index
    %c0_22 = arith.constant 0 : index
    %44 = vector.load %arg1[%c0_21, %c1, %c0_22] : memref<2x8x128xf32, #tpu.memory_space<vmem>>, vector<2x1x128xf32>
    %45 = vector.shape_cast %44 : vector<2x1x128xf32> to vector<2x128xf32>
    %46 = arith.truncf %41 : vector<2x32xf32> to vector<2x32xbf16>
    %cst_23 = arith.constant dense<0.000000e+00> : vector<2x128xf32>
    %47 = tpu.matmul %46, %3, %cst_23 {dimension_numbers = #tpu.dot_dimension_numbers<[1], [0], [0], [1], [0, 0, 1, 1], [], []>} : vector<2x32xbf16>, vector<32x128xbf16>, vector<2x128xf32> -> vector<2x128xf32>
    %48 = arith.addf %45, %47 : vector<2x128xf32>
    %49 = vector.extract_strided_slice %48 {offsets = [0, 0], sizes = [2, 32], strides = [1, 1]} : vector<2x128xf32> to vector<2x32xf32>
    %cst_24 = arith.constant 5.000000e-01 : f32
    %50 = vector.broadcast %cst_24 : f32 to vector<2x32xf32>
    %51 = arith.mulf %50, %49 : vector<2x32xf32>
    %52 = math.tanh %51 : vector<2x32xf32>
    %cst_25 = arith.constant 5.000000e-01 : f32
    %53 = vector.broadcast %cst_25 : f32 to vector<2x32xf32>
    %54 = arith.mulf %53, %52 : vector<2x32xf32>
    %cst_26 = arith.constant 5.000000e-01 : f32
    %55 = vector.broadcast %cst_26 : f32 to vector<2x32xf32>
    %56 = arith.addf %54, %55 : vector<2x32xf32>
    %57 = vector.extract_strided_slice %48 {offsets = [0, 32], sizes = [2, 32], strides = [1, 1]} : vector<2x128xf32> to vector<2x32xf32>
    %cst_27 = arith.constant 5.000000e-01 : f32
    %58 = vector.broadcast %cst_27 : f32 to vector<2x32xf32>
    %59 = arith.mulf %58, %57 : vector<2x32xf32>
    %60 = math.tanh %59 : vector<2x32xf32>
    %cst_28 = arith.constant 5.000000e-01 : f32
    %61 = vector.broadcast %cst_28 : f32 to vector<2x32xf32>
    %62 = arith.mulf %61, %60 : vector<2x32xf32>
    %cst_29 = arith.constant 5.000000e-01 : f32
    %63 = vector.broadcast %cst_29 : f32 to vector<2x32xf32>
    %64 = arith.addf %62, %63 : vector<2x32xf32>
    %65 = vector.extract_strided_slice %48 {offsets = [0, 64], sizes = [2, 32], strides = [1, 1]} : vector<2x128xf32> to vector<2x32xf32>
    %66 = math.tanh %65 : vector<2x32xf32>
    %67 = vector.extract_strided_slice %48 {offsets = [0, 96], sizes = [2, 32], strides = [1, 1]} : vector<2x128xf32> to vector<2x32xf32>
    %cst_30 = arith.constant 5.000000e-01 : f32
    %68 = vector.broadcast %cst_30 : f32 to vector<2x32xf32>
    %69 = arith.mulf %68, %67 : vector<2x32xf32>
    %70 = math.tanh %69 : vector<2x32xf32>
    %cst_31 = arith.constant 5.000000e-01 : f32
    %71 = vector.broadcast %cst_31 : f32 to vector<2x32xf32>
    %72 = arith.mulf %71, %70 : vector<2x32xf32>
    %cst_32 = arith.constant 5.000000e-01 : f32
    %73 = vector.broadcast %cst_32 : f32 to vector<2x32xf32>
    %74 = arith.addf %72, %73 : vector<2x32xf32>
    %75 = arith.mulf %64, %39 : vector<2x32xf32>
    %76 = arith.mulf %56, %66 : vector<2x32xf32>
    %77 = arith.addf %75, %76 : vector<2x32xf32>
    %78 = math.tanh %77 : vector<2x32xf32>
    %79 = arith.mulf %74, %78 : vector<2x32xf32>
    %80 = vector.shape_cast %79 : vector<2x32xf32> to vector<2x1x32xf32>
    %c0_33 = arith.constant 0 : index
    %c1_34 = arith.constant 1 : index
    %c0_35 = arith.constant 0 : index
    %81 = vector.load %arg3[%c0_33, %c1_34, %c0_35] : memref<2x8x32xf32, #tpu.memory_space<vmem>>, vector<2x1x32xf32>
    tpu.vector_store %arg3[%c0_33, %c1_34, %c0_35], %80 {strides = array<i32>} : memref<2x8x32xf32, #tpu.memory_space<vmem>>, vector<2x1x32xf32>,
    %c0_36 = arith.constant 0 : index
    %c2 = arith.constant 2 : index
    %c0_37 = arith.constant 0 : index
    %82 = vector.load %arg1[%c0_36, %c2, %c0_37] : memref<2x8x128xf32, #tpu.memory_space<vmem>>, vector<2x1x128xf32>
    %83 = vector.shape_cast %82 : vector<2x1x128xf32> to vector<2x128xf32>
    %84 = arith.truncf %79 : vector<2x32xf32> to vector<2x32xbf16>
    %cst_38 = arith.constant dense<0.000000e+00> : vector<2x128xf32>
    %85 = tpu.matmul %84, %3, %cst_38 {dimension_numbers = #tpu.dot_dimension_numbers<[1], [0], [0], [1], [0, 0, 1, 1], [], []>} : vector<2x32xbf16>, vector<32x128xbf16>, vector<2x128xf32> -> vector<2x128xf32>
    %86 = arith.addf %83, %85 : vector<2x128xf32>
    %87 = vector.extract_strided_slice %86 {offsets = [0, 0], sizes = [2, 32], strides = [1, 1]} : vector<2x128xf32> to vector<2x32xf32>
    %cst_39 = arith.constant 5.000000e-01 : f32
    %88 = vector.broadcast %cst_39 : f32 to vector<2x32xf32>
    %89 = arith.mulf %88, %87 : vector<2x32xf32>
    %90 = math.tanh %89 : vector<2x32xf32>
    %cst_40 = arith.constant 5.000000e-01 : f32
    %91 = vector.broadcast %cst_40 : f32 to vector<2x32xf32>
    %92 = arith.mulf %91, %90 : vector<2x32xf32>
    %cst_41 = arith.constant 5.000000e-01 : f32
    %93 = vector.broadcast %cst_41 : f32 to vector<2x32xf32>
    %94 = arith.addf %92, %93 : vector<2x32xf32>
    %95 = vector.extract_strided_slice %86 {offsets = [0, 32], sizes = [2, 32], strides = [1, 1]} : vector<2x128xf32> to vector<2x32xf32>
    %cst_42 = arith.constant 5.000000e-01 : f32
    %96 = vector.broadcast %cst_42 : f32 to vector<2x32xf32>
    %97 = arith.mulf %96, %95 : vector<2x32xf32>
    %98 = math.tanh %97 : vector<2x32xf32>
    %cst_43 = arith.constant 5.000000e-01 : f32
    %99 = vector.broadcast %cst_43 : f32 to vector<2x32xf32>
    %100 = arith.mulf %99, %98 : vector<2x32xf32>
    %cst_44 = arith.constant 5.000000e-01 : f32
    %101 = vector.broadcast %cst_44 : f32 to vector<2x32xf32>
    %102 = arith.addf %100, %101 : vector<2x32xf32>
    %103 = vector.extract_strided_slice %86 {offsets = [0, 64], sizes = [2, 32], strides = [1, 1]} : vector<2x128xf32> to vector<2x32xf32>
    %104 = math.tanh %103 : vector<2x32xf32>
    %105 = vector.extract_strided_slice %86 {offsets = [0, 96], sizes = [2, 32], strides = [1, 1]} : vector<2x128xf32> to vector<2x32xf32>
    %cst_45 = arith.constant 5.000000e-01 : f32
    %106 = vector.broadcast %cst_45 : f32 to vector<2x32xf32>
    %107 = arith.mulf %106, %105 : vector<2x32xf32>
    %108 = math.tanh %107 : vector<2x32xf32>
    %cst_46 = arith.constant 5.000000e-01 : f32
    %109 = vector.broadcast %cst_46 : f32 to vector<2x32xf32>
    %110 = arith.mulf %109, %108 : vector<2x32xf32>
    %cst_47 = arith.constant 5.000000e-01 : f32
    %111 = vector.broadcast %cst_47 : f32 to vector<2x32xf32>
    %112 = arith.addf %110, %111 : vector<2x32xf32>
    %113 = arith.mulf %102, %77 : vector<2x32xf32>
    %114 = arith.mulf %94, %104 : vector<2x32xf32>
    %115 = arith.addf %113, %114 : vector<2x32xf32>
    %116 = math.tanh %115 : vector<2x32xf32>
    %117 = arith.mulf %112, %116 : vector<2x32xf32>
    %118 = vector.shape_cast %117 : vector<2x32xf32> to vector<2x1x32xf32>
    %c0_48 = arith.constant 0 : index
    %c2_49 = arith.constant 2 : index
    %c0_50 = arith.constant 0 : index
    %119 = vector.load %arg3[%c0_48, %c2_49, %c0_50] : memref<2x8x32xf32, #tpu.memory_space<vmem>>, vector<2x1x32xf32>
    tpu.vector_store %arg3[%c0_48, %c2_49, %c0_50], %118 {strides = array<i32>} : memref<2x8x32xf32, #tpu.memory_space<vmem>>, vector<2x1x32xf32>,
    %c0_51 = arith.constant 0 : index
    %c3 = arith.constant 3 : index
    %c0_52 = arith.constant 0 : index
    %120 = vector.load %arg1[%c0_51, %c3, %c0_52] : memref<2x8x128xf32, #tpu.memory_space<vmem>>, vector<2x1x128xf32>
    %121 = vector.shape_cast %120 : vector<2x1x128xf32> to vector<2x128xf32>
    %122 = arith.truncf %117 : vector<2x32xf32> to vector<2x32xbf16>
    %cst_53 = arith.constant dense<0.000000e+00> : vector<2x128xf32>
    %123 = tpu.matmul %122, %3, %cst_53 {dimension_numbers = #tpu.dot_dimension_numbers<[1], [0], [0], [1], [0, 0, 1, 1], [], []>} : vector<2x32xbf16>, vector<32x128xbf16>, vector<2x128xf32> -> vector<2x128xf32>
    %124 = arith.addf %121, %123 : vector<2x128xf32>
    %125 = vector.extract_strided_slice %124 {offsets = [0, 0], sizes = [2, 32], strides = [1, 1]} : vector<2x128xf32> to vector<2x32xf32>
    %cst_54 = arith.constant 5.000000e-01 : f32
    %126 = vector.broadcast %cst_54 : f32 to vector<2x32xf32>
    %127 = arith.mulf %126, %125 : vector<2x32xf32>
    %128 = math.tanh %127 : vector<2x32xf32>
    %cst_55 = arith.constant 5.000000e-01 : f32
    %129 = vector.broadcast %cst_55 : f32 to vector<2x32xf32>
    %130 = arith.mulf %129, %128 : vector<2x32xf32>
    %cst_56 = arith.constant 5.000000e-01 : f32
    %131 = vector.broadcast %cst_56 : f32 to vector<2x32xf32>
    %132 = arith.addf %130, %131 : vector<2x32xf32>
    %133 = vector.extract_strided_slice %124 {offsets = [0, 32], sizes = [2, 32], strides = [1, 1]} : vector<2x128xf32> to vector<2x32xf32>
    %cst_57 = arith.constant 5.000000e-01 : f32
    %134 = vector.broadcast %cst_57 : f32 to vector<2x32xf32>
    %135 = arith.mulf %134, %133 : vector<2x32xf32>
    %136 = math.tanh %135 : vector<2x32xf32>
    %cst_58 = arith.constant 5.000000e-01 : f32
    %137 = vector.broadcast %cst_58 : f32 to vector<2x32xf32>
    %138 = arith.mulf %137, %136 : vector<2x32xf32>
    %cst_59 = arith.constant 5.000000e-01 : f32
    %139 = vector.broadcast %cst_59 : f32 to vector<2x32xf32>
    %140 = arith.addf %138, %139 : vector<2x32xf32>
    %141 = vector.extract_strided_slice %124 {offsets = [0, 64], sizes = [2, 32], strides = [1, 1]} : vector<2x128xf32> to vector<2x32xf32>
    %142 = math.tanh %141 : vector<2x32xf32>
    %143 = vector.extract_strided_slice %124 {offsets = [0, 96], sizes = [2, 32], strides = [1, 1]} : vector<2x128xf32> to vector<2x32xf32>
    %cst_60 = arith.constant 5.000000e-01 : f32
    %144 = vector.broadcast %cst_60 : f32 to vector<2x32xf32>
    %145 = arith.mulf %144, %143 : vector<2x32xf32>
    %146 = math.tanh %145 : vector<2x32xf32>
    %cst_61 = arith.constant 5.000000e-01 : f32
    %147 = vector.broadcast %cst_61 : f32 to vector<2x32xf32>
    %148 = arith.mulf %147, %146 : vector<2x32xf32>
    %cst_62 = arith.constant 5.000000e-01 : f32
    %149 = vector.broadcast %cst_62 : f32 to vector<2x32xf32>
    %150 = arith.addf %148, %149 : vector<2x32xf32>
    %151 = arith.mulf %140, %115 : vector<2x32xf32>
    %152 = arith.mulf %132, %142 : vector<2x32xf32>
    %153 = arith.addf %151, %152 : vector<2x32xf32>
    %154 = math.tanh %153 : vector<2x32xf32>
    %155 = arith.mulf %150, %154 : vector<2x32xf32>
    %156 = vector.shape_cast %155 : vector<2x32xf32> to vector<2x1x32xf32>
    %c0_63 = arith.constant 0 : index
    %c3_64 = arith.constant 3 : index
    %c0_65 = arith.constant 0 : index
    %157 = vector.load %arg3[%c0_63, %c3_64, %c0_65] : memref<2x8x32xf32, #tpu.memory_space<vmem>>, vector<2x1x32xf32>
    tpu.vector_store %arg3[%c0_63, %c3_64, %c0_65], %156 {strides = array<i32>} : memref<2x8x32xf32, #tpu.memory_space<vmem>>, vector<2x1x32xf32>,
    %c0_66 = arith.constant 0 : index
    %c4 = arith.constant 4 : index
    %c0_67 = arith.constant 0 : index
    %158 = vector.load %arg1[%c0_66, %c4, %c0_67] : memref<2x8x128xf32, #tpu.memory_space<vmem>>, vector<2x1x128xf32>
    %159 = vector.shape_cast %158 : vector<2x1x128xf32> to vector<2x128xf32>
    %160 = arith.truncf %155 : vector<2x32xf32> to vector<2x32xbf16>
    %cst_68 = arith.constant dense<0.000000e+00> : vector<2x128xf32>
    %161 = tpu.matmul %160, %3, %cst_68 {dimension_numbers = #tpu.dot_dimension_numbers<[1], [0], [0], [1], [0, 0, 1, 1], [], []>} : vector<2x32xbf16>, vector<32x128xbf16>, vector<2x128xf32> -> vector<2x128xf32>
    %162 = arith.addf %159, %161 : vector<2x128xf32>
    %163 = vector.extract_strided_slice %162 {offsets = [0, 0], sizes = [2, 32], strides = [1, 1]} : vector<2x128xf32> to vector<2x32xf32>
    %cst_69 = arith.constant 5.000000e-01 : f32
    %164 = vector.broadcast %cst_69 : f32 to vector<2x32xf32>
    %165 = arith.mulf %164, %163 : vector<2x32xf32>
    %166 = math.tanh %165 : vector<2x32xf32>
    %cst_70 = arith.constant 5.000000e-01 : f32
    %167 = vector.broadcast %cst_70 : f32 to vector<2x32xf32>
    %168 = arith.mulf %167, %166 : vector<2x32xf32>
    %cst_71 = arith.constant 5.000000e-01 : f32
    %169 = vector.broadcast %cst_71 : f32 to vector<2x32xf32>
    %170 = arith.addf %168, %169 : vector<2x32xf32>
    %171 = vector.extract_strided_slice %162 {offsets = [0, 32], sizes = [2, 32], strides = [1, 1]} : vector<2x128xf32> to vector<2x32xf32>
    %cst_72 = arith.constant 5.000000e-01 : f32
    %172 = vector.broadcast %cst_72 : f32 to vector<2x32xf32>
    %173 = arith.mulf %172, %171 : vector<2x32xf32>
    %174 = math.tanh %173 : vector<2x32xf32>
    %cst_73 = arith.constant 5.000000e-01 : f32
    %175 = vector.broadcast %cst_73 : f32 to vector<2x32xf32>
    %176 = arith.mulf %175, %174 : vector<2x32xf32>
    %cst_74 = arith.constant 5.000000e-01 : f32
    %177 = vector.broadcast %cst_74 : f32 to vector<2x32xf32>
    %178 = arith.addf %176, %177 : vector<2x32xf32>
    %179 = vector.extract_strided_slice %162 {offsets = [0, 64], sizes = [2, 32], strides = [1, 1]} : vector<2x128xf32> to vector<2x32xf32>
    %180 = math.tanh %179 : vector<2x32xf32>
    %181 = vector.extract_strided_slice %162 {offsets = [0, 96], sizes = [2, 32], strides = [1, 1]} : vector<2x128xf32> to vector<2x32xf32>
    %cst_75 = arith.constant 5.000000e-01 : f32
    %182 = vector.broadcast %cst_75 : f32 to vector<2x32xf32>
    %183 = arith.mulf %182, %181 : vector<2x32xf32>
    %184 = math.tanh %183 : vector<2x32xf32>
    %cst_76 = arith.constant 5.000000e-01 : f32
    %185 = vector.broadcast %cst_76 : f32 to vector<2x32xf32>
    %186 = arith.mulf %185, %184 : vector<2x32xf32>
    %cst_77 = arith.constant 5.000000e-01 : f32
    %187 = vector.broadcast %cst_77 : f32 to vector<2x32xf32>
    %188 = arith.addf %186, %187 : vector<2x32xf32>
    %189 = arith.mulf %178, %153 : vector<2x32xf32>
    %190 = arith.mulf %170, %180 : vector<2x32xf32>
    %191 = arith.addf %189, %190 : vector<2x32xf32>
    %192 = math.tanh %191 : vector<2x32xf32>
    %193 = arith.mulf %188, %192 : vector<2x32xf32>
    %194 = vector.shape_cast %193 : vector<2x32xf32> to vector<2x1x32xf32>
    %c0_78 = arith.constant 0 : index
    %c4_79 = arith.constant 4 : index
    %c0_80 = arith.constant 0 : index
    %195 = vector.load %arg3[%c0_78, %c4_79, %c0_80] : memref<2x8x32xf32, #tpu.memory_space<vmem>>, vector<2x1x32xf32>
    tpu.vector_store %arg3[%c0_78, %c4_79, %c0_80], %194 {strides = array<i32>} : memref<2x8x32xf32, #tpu.memory_space<vmem>>, vector<2x1x32xf32>,
    %c0_81 = arith.constant 0 : index
    %c5 = arith.constant 5 : index
    %c0_82 = arith.constant 0 : index
    %196 = vector.load %arg1[%c0_81, %c5, %c0_82] : memref<2x8x128xf32, #tpu.memory_space<vmem>>, vector<2x1x128xf32>
    %197 = vector.shape_cast %196 : vector<2x1x128xf32> to vector<2x128xf32>
    %198 = arith.truncf %193 : vector<2x32xf32> to vector<2x32xbf16>
    %cst_83 = arith.constant dense<0.000000e+00> : vector<2x128xf32>
    %199 = tpu.matmul %198, %3, %cst_83 {dimension_numbers = #tpu.dot_dimension_numbers<[1], [0], [0], [1], [0, 0, 1, 1], [], []>} : vector<2x32xbf16>, vector<32x128xbf16>, vector<2x128xf32> -> vector<2x128xf32>
    %200 = arith.addf %197, %199 : vector<2x128xf32>
    %201 = vector.extract_strided_slice %200 {offsets = [0, 0], sizes = [2, 32], strides = [1, 1]} : vector<2x128xf32> to vector<2x32xf32>
    %cst_84 = arith.constant 5.000000e-01 : f32
    %202 = vector.broadcast %cst_84 : f32 to vector<2x32xf32>
    %203 = arith.mulf %202, %201 : vector<2x32xf32>
    %204 = math.tanh %203 : vector<2x32xf32>
    %cst_85 = arith.constant 5.000000e-01 : f32
    %205 = vector.broadcast %cst_85 : f32 to vector<2x32xf32>
    %206 = arith.mulf %205, %204 : vector<2x32xf32>
    %cst_86 = arith.constant 5.000000e-01 : f32
    %207 = vector.broadcast %cst_86 : f32 to vector<2x32xf32>
    %208 = arith.addf %206, %207 : vector<2x32xf32>
    %209 = vector.extract_strided_slice %200 {offsets = [0, 32], sizes = [2, 32], strides = [1, 1]} : vector<2x128xf32> to vector<2x32xf32>
    %cst_87 = arith.constant 5.000000e-01 : f32
    %210 = vector.broadcast %cst_87 : f32 to vector<2x32xf32>
    %211 = arith.mulf %210, %209 : vector<2x32xf32>
    %212 = math.tanh %211 : vector<2x32xf32>
    %cst_88 = arith.constant 5.000000e-01 : f32
    %213 = vector.broadcast %cst_88 : f32 to vector<2x32xf32>
    %214 = arith.mulf %213, %212 : vector<2x32xf32>
    %cst_89 = arith.constant 5.000000e-01 : f32
    %215 = vector.broadcast %cst_89 : f32 to vector<2x32xf32>
    %216 = arith.addf %214, %215 : vector<2x32xf32>
    %217 = vector.extract_strided_slice %200 {offsets = [0, 64], sizes = [2, 32], strides = [1, 1]} : vector<2x128xf32> to vector<2x32xf32>
    %218 = math.tanh %217 : vector<2x32xf32>
    %219 = vector.extract_strided_slice %200 {offsets = [0, 96], sizes = [2, 32], strides = [1, 1]} : vector<2x128xf32> to vector<2x32xf32>
    %cst_90 = arith.constant 5.000000e-01 : f32
    %220 = vector.broadcast %cst_90 : f32 to vector<2x32xf32>
    %221 = arith.mulf %220, %219 : vector<2x32xf32>
    %222 = math.tanh %221 : vector<2x32xf32>
    %cst_91 = arith.constant 5.000000e-01 : f32
    %223 = vector.broadcast %cst_91 : f32 to vector<2x32xf32>
    %224 = arith.mulf %223, %222 : vector<2x32xf32>
    %cst_92 = arith.constant 5.000000e-01 : f32
    %225 = vector.broadcast %cst_92 : f32 to vector<2x32xf32>
    %226 = arith.addf %224, %225 : vector<2x32xf32>
    %227 = arith.mulf %216, %191 : vector<2x32xf32>
    %228 = arith.mulf %208, %218 : vector<2x32xf32>
    %229 = arith.addf %227, %228 : vector<2x32xf32>
    %230 = math.tanh %229 : vector<2x32xf32>
    %231 = arith.mulf %226, %230 : vector<2x32xf32>
    %232 = vector.shape_cast %231 : vector<2x32xf32> to vector<2x1x32xf32>
    %c0_93 = arith.constant 0 : index
    %c5_94 = arith.constant 5 : index
    %c0_95 = arith.constant 0 : index
    %233 = vector.load %arg3[%c0_93, %c5_94, %c0_95] : memref<2x8x32xf32, #tpu.memory_space<vmem>>, vector<2x1x32xf32>
    tpu.vector_store %arg3[%c0_93, %c5_94, %c0_95], %232 {strides = array<i32>} : memref<2x8x32xf32, #tpu.memory_space<vmem>>, vector<2x1x32xf32>,
    %c0_96 = arith.constant 0 : index
    %c6 = arith.constant 6 : index
    %c0_97 = arith.constant 0 : index
    %234 = vector.load %arg1[%c0_96, %c6, %c0_97] : memref<2x8x128xf32, #tpu.memory_space<vmem>>, vector<2x1x128xf32>
    %235 = vector.shape_cast %234 : vector<2x1x128xf32> to vector<2x128xf32>
    %236 = arith.truncf %231 : vector<2x32xf32> to vector<2x32xbf16>
    %cst_98 = arith.constant dense<0.000000e+00> : vector<2x128xf32>
    %237 = tpu.matmul %236, %3, %cst_98 {dimension_numbers = #tpu.dot_dimension_numbers<[1], [0], [0], [1], [0, 0, 1, 1], [], []>} : vector<2x32xbf16>, vector<32x128xbf16>, vector<2x128xf32> -> vector<2x128xf32>
    %238 = arith.addf %235, %237 : vector<2x128xf32>
    %239 = vector.extract_strided_slice %238 {offsets = [0, 0], sizes = [2, 32], strides = [1, 1]} : vector<2x128xf32> to vector<2x32xf32>
    %cst_99 = arith.constant 5.000000e-01 : f32
    %240 = vector.broadcast %cst_99 : f32 to vector<2x32xf32>
    %241 = arith.mulf %240, %239 : vector<2x32xf32>
    %242 = math.tanh %241 : vector<2x32xf32>
    %cst_100 = arith.constant 5.000000e-01 : f32
    %243 = vector.broadcast %cst_100 : f32 to vector<2x32xf32>
    %244 = arith.mulf %243, %242 : vector<2x32xf32>
    %cst_101 = arith.constant 5.000000e-01 : f32
    %245 = vector.broadcast %cst_101 : f32 to vector<2x32xf32>
    %246 = arith.addf %244, %245 : vector<2x32xf32>
    %247 = vector.extract_strided_slice %238 {offsets = [0, 32], sizes = [2, 32], strides = [1, 1]} : vector<2x128xf32> to vector<2x32xf32>
    %cst_102 = arith.constant 5.000000e-01 : f32
    %248 = vector.broadcast %cst_102 : f32 to vector<2x32xf32>
    %249 = arith.mulf %248, %247 : vector<2x32xf32>
    %250 = math.tanh %249 : vector<2x32xf32>
    %cst_103 = arith.constant 5.000000e-01 : f32
    %251 = vector.broadcast %cst_103 : f32 to vector<2x32xf32>
    %252 = arith.mulf %251, %250 : vector<2x32xf32>
    %cst_104 = arith.constant 5.000000e-01 : f32
    %253 = vector.broadcast %cst_104 : f32 to vector<2x32xf32>
    %254 = arith.addf %252, %253 : vector<2x32xf32>
    %255 = vector.extract_strided_slice %238 {offsets = [0, 64], sizes = [2, 32], strides = [1, 1]} : vector<2x128xf32> to vector<2x32xf32>
    %256 = math.tanh %255 : vector<2x32xf32>
    %257 = vector.extract_strided_slice %238 {offsets = [0, 96], sizes = [2, 32], strides = [1, 1]} : vector<2x128xf32> to vector<2x32xf32>
    %cst_105 = arith.constant 5.000000e-01 : f32
    %258 = vector.broadcast %cst_105 : f32 to vector<2x32xf32>
    %259 = arith.mulf %258, %257 : vector<2x32xf32>
    %260 = math.tanh %259 : vector<2x32xf32>
    %cst_106 = arith.constant 5.000000e-01 : f32
    %261 = vector.broadcast %cst_106 : f32 to vector<2x32xf32>
    %262 = arith.mulf %261, %260 : vector<2x32xf32>
    %cst_107 = arith.constant 5.000000e-01 : f32
    %263 = vector.broadcast %cst_107 : f32 to vector<2x32xf32>
    %264 = arith.addf %262, %263 : vector<2x32xf32>
    %265 = arith.mulf %254, %229 : vector<2x32xf32>
    %266 = arith.mulf %246, %256 : vector<2x32xf32>
    %267 = arith.addf %265, %266 : vector<2x32xf32>
    %268 = math.tanh %267 : vector<2x32xf32>
    %269 = arith.mulf %264, %268 : vector<2x32xf32>
    %270 = vector.shape_cast %269 : vector<2x32xf32> to vector<2x1x32xf32>
    %c0_108 = arith.constant 0 : index
    %c6_109 = arith.constant 6 : index
    %c0_110 = arith.constant 0 : index
    %271 = vector.load %arg3[%c0_108, %c6_109, %c0_110] : memref<2x8x32xf32, #tpu.memory_space<vmem>>, vector<2x1x32xf32>
    tpu.vector_store %arg3[%c0_108, %c6_109, %c0_110], %270 {strides = array<i32>} : memref<2x8x32xf32, #tpu.memory_space<vmem>>, vector<2x1x32xf32>,
    %c0_111 = arith.constant 0 : index
    %c7 = arith.constant 7 : index
    %c0_112 = arith.constant 0 : index
    %272 = vector.load %arg1[%c0_111, %c7, %c0_112] : memref<2x8x128xf32, #tpu.memory_space<vmem>>, vector<2x1x128xf32>
    %273 = vector.shape_cast %272 : vector<2x1x128xf32> to vector<2x128xf32>
    %274 = arith.truncf %269 : vector<2x32xf32> to vector<2x32xbf16>
    %cst_113 = arith.constant dense<0.000000e+00> : vector<2x128xf32>
    %275 = tpu.matmul %274, %3, %cst_113 {dimension_numbers = #tpu.dot_dimension_numbers<[1], [0], [0], [1], [0, 0, 1, 1], [], []>} : vector<2x32xbf16>, vector<32x128xbf16>, vector<2x128xf32> -> vector<2x128xf32>
    %276 = arith.addf %273, %275 : vector<2x128xf32>
    %277 = vector.extract_strided_slice %276 {offsets = [0, 0], sizes = [2, 32], strides = [1, 1]} : vector<2x128xf32> to vector<2x32xf32>
    %cst_114 = arith.constant 5.000000e-01 : f32
    %278 = vector.broadcast %cst_114 : f32 to vector<2x32xf32>
    %279 = arith.mulf %278, %277 : vector<2x32xf32>
    %280 = math.tanh %279 : vector<2x32xf32>
    %cst_115 = arith.constant 5.000000e-01 : f32
    %281 = vector.broadcast %cst_115 : f32 to vector<2x32xf32>
    %282 = arith.mulf %281, %280 : vector<2x32xf32>
    %cst_116 = arith.constant 5.000000e-01 : f32
    %283 = vector.broadcast %cst_116 : f32 to vector<2x32xf32>
    %284 = arith.addf %282, %283 : vector<2x32xf32>
    %285 = vector.extract_strided_slice %276 {offsets = [0, 32], sizes = [2, 32], strides = [1, 1]} : vector<2x128xf32> to vector<2x32xf32>
    %cst_117 = arith.constant 5.000000e-01 : f32
    %286 = vector.broadcast %cst_117 : f32 to vector<2x32xf32>
    %287 = arith.mulf %286, %285 : vector<2x32xf32>
    %288 = math.tanh %287 : vector<2x32xf32>
    %cst_118 = arith.constant 5.000000e-01 : f32
    %289 = vector.broadcast %cst_118 : f32 to vector<2x32xf32>
    %290 = arith.mulf %289, %288 : vector<2x32xf32>
    %cst_119 = arith.constant 5.000000e-01 : f32
    %291 = vector.broadcast %cst_119 : f32 to vector<2x32xf32>
    %292 = arith.addf %290, %291 : vector<2x32xf32>
    %293 = vector.extract_strided_slice %276 {offsets = [0, 64], sizes = [2, 32], strides = [1, 1]} : vector<2x128xf32> to vector<2x32xf32>
    %294 = math.tanh %293 : vector<2x32xf32>
    %295 = vector.extract_strided_slice %276 {offsets = [0, 96], sizes = [2, 32], strides = [1, 1]} : vector<2x128xf32> to vector<2x32xf32>
    %cst_120 = arith.constant 5.000000e-01 : f32
    %296 = vector.broadcast %cst_120 : f32 to vector<2x32xf32>
    %297 = arith.mulf %296, %295 : vector<2x32xf32>
    %298 = math.tanh %297 : vector<2x32xf32>
    %cst_121 = arith.constant 5.000000e-01 : f32
    %299 = vector.broadcast %cst_121 : f32 to vector<2x32xf32>
    %300 = arith.mulf %299, %298 : vector<2x32xf32>
    %cst_122 = arith.constant 5.000000e-01 : f32
    %301 = vector.broadcast %cst_122 : f32 to vector<2x32xf32>
    %302 = arith.addf %300, %301 : vector<2x32xf32>
    %303 = arith.mulf %292, %267 : vector<2x32xf32>
    %304 = arith.mulf %284, %294 : vector<2x32xf32>
    %305 = arith.addf %303, %304 : vector<2x32xf32>
    %306 = math.tanh %305 : vector<2x32xf32>
    %307 = arith.mulf %302, %306 : vector<2x32xf32>
    %308 = vector.shape_cast %307 : vector<2x32xf32> to vector<2x1x32xf32>
    %c0_123 = arith.constant 0 : index
    %c7_124 = arith.constant 7 : index
    %c0_125 = arith.constant 0 : index
    %309 = vector.load %arg3[%c0_123, %c7_124, %c0_125] : memref<2x8x32xf32, #tpu.memory_space<vmem>>, vector<2x1x32xf32>
    tpu.vector_store %arg3[%c0_123, %c7_124, %c0_125], %308 {strides = array<i32>} : memref<2x8x32xf32, #tpu.memory_space<vmem>>, vector<2x1x32xf32>,
    %c0_126 = arith.constant 0 : index
    %c0_127 = arith.constant 0 : index
    %310 = vector.load %arg4[%c0_126, %c0_127] : memref<2x32xf32, #tpu.memory_space<vmem>>, vector<2x32xf32>
    tpu.vector_store %arg4[%c0_126, %c0_127], %307 {strides = array<i32>} : memref<2x32xf32, #tpu.memory_space<vmem>>, vector<2x32xf32>,
    %c0_128 = arith.constant 0 : index
    %c0_129 = arith.constant 0 : index
    %311 = vector.load %arg5[%c0_128, %c0_129] : memref<2x32xf32, #tpu.memory_space<vmem>>, vector<2x32xf32>
    tpu.vector_store %arg5[%c0_128, %c0_129], %305 {strides = array<i32>} : memref<2x32xf32, #tpu.memory_space<vmem>>, vector<2x32xf32>,
    return
  }
  func.func @transform_0(%arg0: i32) -> (i32, i32, i32) {
    %c0_i32 = arith.constant 0 : i32
    %c0_i32_0 = arith.constant 0 : i32
    %c0_i32_1 = arith.constant 0 : i32
    return %c0_i32, %arg0, %c0_i32_0 : i32, i32, i32
  }
  func.func @transform_1(%arg0: i32) -> (i32, i32) {
    %c0_i32 = arith.constant 0 : i32
    %c0_i32_0 = arith.constant 0 : i32
    %c0_i32_1 = arith.constant 0 : i32
    return %c0_i32, %c0_i32_0 : i32, i32
  }
  func.func @transform_2(%arg0: i32) -> (i32, i32, i32) {
    %c0_i32 = arith.constant 0 : i32
    %c0_i32_0 = arith.constant 0 : i32
    %c0_i32_1 = arith.constant 0 : i32
    return %c0_i32, %arg0, %c0_i32_0 : i32, i32, i32
  }
}

</mosaic_0001>

<llo_original>
// kernel: modeling_forward.1
$region0: #{modeling_forward.1}
  #allocation0 [shape = 'u32[]', space=smem, size = 0x4, offset = 0x4, fixed_abs, tag = 'smem constant byte address 0x4 - core index']
  #allocation1 [shape = 'u32[144,128]{1,0:T(1,128)}', space=vmem, size = 0x12000, scoped, tag = 'internal scratch']
  #allocation2 [shape = 'f32[2,32]{1,0:T(2,128)}', space=vmem, size = 0x400, scoped, tag = 'scratch operand']
  #allocation3 [shape = 'f32[2,32]{1,0:T(2,128)}', space=vmem, size = 0x400, scoped, tag = 'scratch operand']
  %s0 = inlined_call_operand.vmem [shape: f32[2,8,128], index: 0, kind: input, shape index: {}]
  %s1 = inlined_call_operand.vmem [shape: bf16[32,128], index: 1, kind: input, shape index: {}]
  %s2 = inlined_call_operand.hbm [shape: f32[2,8,32], index: 2, kind: output, shape index: {}]
  %s3 = sld [smem:[#allocation0]]
  $region22: #{modeling_forward.1} parent=0
    _
  %s5 = ssub.s32 1, %s3
  %s6 = scalar_select 0, %s5, %s3
  $region1: #{modeling_forward.1} parent=0
    #allocation4 [shape = 'u8[8192]{0}', space=vmem, size = 0x2000, scoped, tag = 'output window, operand 0, single buffered']
    #allocation5 [shape = 's32[1]{0}', space=sflag, size = 0x4, scoped, tag = 'scoped memory for modeling_forward.1']
    %7 = vsyncpa [#allocation5], 0
    // Predicated region
    $region2: #{modeling_forward.1} parent=1 // pred_check
      _
    $region3: #{modeling_forward.1} parent=1 // pred_check_branch
      %9 = sbr.rel (0) target = $region5
    $region4: #{modeling_forward.1} parent=1 // pred_region
      _
    $region5: #{modeling_forward.1} parent=1 // pred_fallthru
      _
    // Predicated region
    $region6: #{modeling_forward.1} parent=1 // pred_check
      _
    $region7: #{modeling_forward.1} parent=1 // pred_check_branch
      %11 = sbr.rel (0) target = $region9
    $region8: #{modeling_forward.1} parent=1 // pred_region
      _
    $region9: #{modeling_forward.1} parent=1 // pred_fallthru
      _
    %p13 = scmp.eq.s32.totalorder 0, 0
    // Predicated region
    $region10: #{modeling_forward.1} parent=1 // pred_check
      %p14 = pneg %p13
    $region11: #{modeling_forward.1} parent=1 // pred_check_branch
      %16 = sbr.rel (%p14) target = $region13
    $region12: #{modeling_forward.1} parent=1 // pred_region
      %vm17 = vcmask 254976
      %18 = vst.msk [vmem:[#allocation2] sm:$0x3] %vm17, 0.0
      %19 = vst.msk [vmem:[#allocation3] sm:$0x3] %vm17, 0.0
    $region13: #{modeling_forward.1} parent=1 // pred_fallthru
      _
    %v20 = vld [vmem:[%s1] sm:$0xf]
    %v21 = vld [vmem:[%s1 + $0x4] sm:$0xf]
    %v22 = vld [vmem:[%s1 + $0x8] sm:$0xf]
    %v23 = vld [vmem:[%s1 + $0xc] sm:$0xf]
    %v24 = vld [vmem:[#allocation2] sm:$0x3]
    %v25 = vld [vmem:[#allocation3] sm:$0x3]
    %v26 = vld [vmem:[%s0] sm:$0x1]
    %v27 = vld [vmem:[%s0 + $0x8] sm:$0x1]
    %v28 = vpack.c.bf16 %v24, %v24
    %v33 = vunpack.c.l.b16 %v20
    %v34 = vunpack.c.l.b16 %v21
    %v35 = vunpack.c.l.b16 %v22
    %v36 = vunpack.c.l.b16 %v23
    %v37 = vpack.c.b16 %v34, %v33
    %v38 = vpack.c.b16 %v36, %v35
    %vm41 = vcmask 261120
    %v43 = vsel %vm41, %v28, 0
    %45 = vmatprep.subr.bf16.mxu0 0
    %46 = vmatpush1.bf16.msra.mxu0 0
    %47 = vmatprep.subr.bf16.mxu0 0
    %48 = vmatpush1.bf16.msra.mxu0 0
    %49 = vmatprep.subr.bf16.mxu0 0
    %50 = vmatpush1.bf16.msra.mxu0 0
    %51 = vmatprep.subr.bf16.mxu0 0
    %52 = vmatpush1.bf16.msra.mxu0 0
    %53 = vmatprep.subr.bf16.mxu0 0
    %54 = vmatpush1.bf16.msra.mxu0 0
    %55 = vmatprep.subr.bf16.mxu0 0
    %56 = vmatpush1.bf16.msra.mxu0 0
    %57 = vmatprep.subr.bf16.mxu0 0
    %58 = vmatpush1.bf16.msra.mxu0 %v38
    %59 = vmatprep.subr.bf16.mxu0 0
    %60 = vmatpush1.bf16.msra.mxu0 %v37
    %61 = vmatprep.subr.bf16.mxu0 0
    %62 = vmatpush2.bf16.msra.mxu0 0
    %63 = vmatprep.subr.bf16.mxu0 0
    %64 = vmatpush2.bf16.msra.mxu0 0
    %65 = vmatprep.subr.bf16.mxu0 0
    %66 = vmatpush2.bf16.msra.mxu0 0
    %67 = vmatprep.subr.bf16.mxu0 0
    %68 = vmatpush2.bf16.msra.mxu0 0
    %69 = vmatprep.subr.bf16.mxu0 0
    %70 = vmatpush2.bf16.msra.mxu0 0
    %71 = vmatprep.subr.bf16.mxu0 0
    %72 = vmatpush2.bf16.msra.mxu0 0
    %73 = vmatprep.subr.bf16.mxu0 0
    %74 = vmatpush2.bf16.msra.mxu0 0
    %75 = vmatprep.subr.bf16.mxu0 0
    %76 = vmatpush2.bf16.msra.mxu0 0
    %77 = vmatprep.mubr.bf16.mxu0 0
    %78 = vmatmul.mubr.bf16.gmra.mxu0 %v43
    %v79 = vpop.f32.mrf.mxu0
    %v80 = vadd.f32 0.0, %v79
    %v81 = vpop.f32.mrf.mxu0
    %v82 = vpop.f32.mrf.mxu0
    %v83 = vpop.f32.mrf.mxu0
    %84 = vdwg.mxu0
    %v86 = vrot.slane %v80, 1
    %v89 = vadd.f32 %v26, %v80
    %v90 = vadd.f32 %v27, %v86
    %v91 = vmul.f32 %v89, 0.5
    %v92 = vmul.f32 %v90, 0.5
    %v93 = vtanh.pop %v91
    %v94 = vtanh.pop %v92
    %v95 = vmul.f32 %v93, 0.5
    %v96 = vmul.f32 %v94, 0.5
    %v97 = vadd.f32 %v95, 0.5
    %v98 = vadd.f32 %v96, 0.5
    %v99 = vtanh.pop %v89
    %v100 = vtanh.pop %v90
    %v102 = vrot.slane %v25, 1
    %103 = vrot.lane.b32.xlu0 %v25, 32
    %v104 = vpop.permute.xlu0 %103
    %105 = vrot.lane.b32.xlu0 %v102, 32
    %v106 = vpop.permute.xlu0 %105
    %v109 = vmul.f32 %v97, %v104
    %v110 = vmul.f32 %v98, %v106
    %113 = vrot.lane.b32.xlu0 %v99, 64
    %v114 = vpop.permute.xlu0 %113
    %115 = vrot.lane.b32.xlu0 %v100, 64
    %v116 = vpop.permute.xlu0 %115
    %v119 = vmul.f32 %v97, %v114
    %v120 = vmul.f32 %v98, %v116
    %123 = vrot.lane.b32.xlu0 %v119, 32
    %v124 = vpop.permute.xlu0 %123
    %125 = vrot.lane.b32.xlu0 %v120, 32
    %v126 = vpop.permute.xlu0 %125
    %v129 = vadd.f32 %v109, %v124
    %v130 = vadd.f32 %v110, %v126
    %v131 = vtanh.pop %v129
    %v132 = vtanh.pop %v130
    %135 = vrot.lane.b32.xlu0 %v131, 64
    %v136 = vpop.permute.xlu0 %135
    %137 = vrot.lane.b32.xlu0 %v132, 64
    %v138 = vpop.permute.xlu0 %137
    %v141 = vmul.f32 %v97, %v136
    %v142 = vmul.f32 %v98, %v138
    %145 = vrot.lane.b32.xlu0 %v141, 32
    %v146 = vpop.permute.xlu0 %145
    %147 = vrot.lane.b32.xlu0 %v142, 32
    %v148 = vpop.permute.xlu0 %147
    %vm151 = vcmask 253952
    %152 = vst.msk [vmem:[#allocation4] sm:$0x1] %vm151, %v146
    %153 = vst.msk [vmem:[#allocation4 + $0x8] sm:$0x1] %vm151, %v148
    %v154 = vld [vmem:[%s0 + $0x1] sm:$0x1]
    %v155 = vld [vmem:[%s0 + $0x9] sm:$0x1]
    %v156 = vpack.c.bf16 %v141, %v141
    %v157 = vpack.c.bf16 %v142, %v142
    %v160 = vunpack.c.l.b16 %v156
    %v161 = vunpack.c.l.b16 %v157
    %v162 = vrot.slane %v161, 7
    %vm163 = vcmask 1041409
    %v164 = vsel %vm163, %v162, %v160
    %v165 = vpack.c.b16 %v164, %v164
    %166 = vrot.lane.b32.xlu0 %v165, 32
    %v167 = vpop.permute.xlu0 %166
    %v169 = vsel %vm41, %v167, 0
    %171 = vmatprep.subr.bf16.mxu0 0
    %172 = vmatpush1.bf16.msra.mxu0 0
    %173 = vmatprep.subr.bf16.mxu0 0
    %174 = vmatpush1.bf16.msra.mxu0 0
    %175 = vmatprep.subr.bf16.mxu0 0
    %176 = vmatpush1.bf16.msra.mxu0 0
    %177 = vmatprep.subr.bf16.mxu0 0
    %178 = vmatpush1.bf16.msra.mxu0 0
    %179 = vmatprep.subr.bf16.mxu0 0
    %180 = vmatpush1.bf16.msra.mxu0 0
    %181 = vmatprep.subr.bf16.mxu0 0
    %182 = vmatpush1.bf16.msra.mxu0 0
    %183 = vmatprep.subr.bf16.mxu0 0
    %184 = vmatpush1.bf16.msra.mxu0 %v38
    %185 = vmatprep.subr.bf16.mxu0 0
    %186 = vmatpush1.bf16.msra.mxu0 %v37
    %187 = vmatprep.subr.bf16.mxu0 0
    %188 = vmatpush2.bf16.msra.mxu0 0
    %189 = vmatprep.subr.bf16.mxu0 0
    %190 = vmatpush2.bf16.msra.mxu0 0
    %191 = vmatprep.subr.bf16.mxu0 0
    %192 = vmatpush2.bf16.msra.mxu0 0
    %193 = vmatprep.subr.bf16.mxu0 0
    %194 = vmatpush2.bf16.msra.mxu0 0
    %195 = vmatprep.subr.bf16.mxu0 0
    %196 = vmatpush2.bf16.msra.mxu0 0
    %197 = vmatprep.subr.bf16.mxu0 0
    %198 = vmatpush2.bf16.msra.mxu0 0
    %199 = vmatprep.subr.bf16.mxu0 0
    %200 = vmatpush2.bf16.msra.mxu0 0
    %201 = vmatprep.subr.bf16.mxu0 0
    %202 = vmatpush2.bf16.msra.mxu0 0
    %203 = vmatprep.mubr.bf16.mxu0 0
    %204 = vmatmul.mubr.bf16.gmra.mxu0 %v169
    %v205 = vpop.f32.mrf.mxu0
    %v206 = vadd.f32 0.0, %v205
    %v207 = vpop.f32.mrf.mxu0
    %v208 = vpop.f32.mrf.mxu0
    %v209 = vpop.f32.mrf.mxu0
    %210 = vdwg.mxu0
    %v212 = vrot.slane %v206, 1
    %v215 = vadd.f32 %v154, %v206
    %v216 = vadd.f32 %v155, %v212
    %v217 = vmul.f32 %v215, 0.5
    %v218 = vmul.f32 %v216, 0.5
    %v219 = vtanh.pop %v217
    %v220 = vtanh.pop %v218
    %v221 = vmul.f32 %v219, 0.5
    %v222 = vmul.f32 %v220, 0.5
    %v223 = vadd.f32 %v221, 0.5
    %v224 = vadd.f32 %v222, 0.5
    %v225 = vtanh.pop %v215
    %v226 = vtanh.pop %v216
    %v227 = vmul.f32 %v223, %v129
    %v228 = vmul.f32 %v224, %v130
    %231 = vrot.lane.b32.xlu0 %v225, 64
    %v232 = vpop.permute.xlu0 %231
    %233 = vrot.lane.b32.xlu0 %v226, 64
    %v234 = vpop.permute.xlu0 %233
    %v237 = vmul.f32 %v223, %v232
    %v238 = vmul.f32 %v224, %v234
    %241 = vrot.lane.b32.xlu0 %v237, 32
    %v242 = vpop.permute.xlu0 %241
    %243 = vrot.lane.b32.xlu0 %v238, 32
    %v244 = vpop.permute.xlu0 %243
    %v247 = vadd.f32 %v227, %v242
    %v248 = vadd.f32 %v228, %v244
    %v249 = vtanh.pop %v247
    %v250 = vtanh.pop %v248
    %253 = vrot.lane.b32.xlu0 %v249, 64
    %v254 = vpop.permute.xlu0 %253
    %255 = vrot.lane.b32.xlu0 %v250, 64
    %v256 = vpop.permute.xlu0 %255
    %v259 = vmul.f32 %v223, %v254
    %v260 = vmul.f32 %v224, %v256
    %263 = vrot.lane.b32.xlu0 %v259, 32
    %v264 = vpop.permute.xlu0 %263
    %265 = vrot.lane.b32.xlu0 %v260, 32
    %v266 = vpop.permute.xlu0 %265
    %269 = vst.msk [vmem:[#allocation4 + $0x1] sm:$0x1] %vm151, %v264
    %270 = vst.msk [vmem:[#allocation4 + $0x9] sm:$0x1] %vm151, %v266
    %v271 = vld [vmem:[%s0 + $0x2] sm:$0x1]
    %v272 = vld [vmem:[%s0 + $0xa] sm:$0x1]
    %v273 = vpack.c.bf16 %v259, %v259
    %v274 = vpack.c.bf16 %v260, %v260
    %v277 = vunpack.c.l.b16 %v273
    %v278 = vunpack.c.l.b16 %v274
    %v279 = vrot.slane %v278, 7
    %v280 = vsel %vm163, %v279, %v277
    %v281 = vpack.c.b16 %v280, %v280
    %282 = vrot.lane.b32.xlu0 %v281, 32
    %v283 = vpop.permute.xlu0 %282
    %v285 = vsel %vm41, %v283, 0
    %287 = vmatprep.subr.bf16.mxu0 0
    %288 = vmatpush1.bf16.msra.mxu0 0
    %289 = vmatprep.subr.bf16.mxu0 0
    %290 = vmatpush1.bf16.msra.mxu0 0
    %291 = vmatprep.subr.bf16.mxu0 0
    %292 = vmatpush1.bf16.msra.mxu0 0
    %293 = vmatprep.subr.bf16.mxu0 0
    %294 = vmatpush1.bf16.msra.mxu0 0
    %295 = vmatprep.subr.bf16.mxu0 0
    %296 = vmatpush1.bf16.msra.mxu0 0
    %297 = vmatprep.subr.bf16.mxu0 0
    %298 = vmatpush1.bf16.msra.mxu0 0
    %299 = vmatprep.subr.bf16.mxu0 0
    %300 = vmatpush1.bf16.msra.mxu0 %v38
    %301 = vmatprep.subr.bf16.mxu0 0
    %302 = vmatpush1.bf16.msra.mxu0 %v37
    %303 = vmatprep.subr.bf16.mxu0 0
    %304 = vmatpush2.bf16.msra.mxu0 0
    %305 = vmatprep.subr.bf16.mxu0 0
    %306 = vmatpush2.bf16.msra.mxu0 0
    %307 = vmatprep.subr.bf16.mxu0 0
    %308 = vmatpush2.bf16.msra.mxu0 0
    %309 = vmatprep.subr.bf16.mxu0 0
    %310 = vmatpush2.bf16.msra.mxu0 0
    %311 = vmatprep.subr.bf16.mxu0 0
    %312 = vmatpush2.bf16.msra.mxu0 0
    %313 = vmatprep.subr.bf16.mxu0 0
    %314 = vmatpush2.bf16.msra.mxu0 0
    %315 = vmatprep.subr.bf16.mxu0 0
    %316 = vmatpush2.bf16.msra.mxu0 0
    %317 = vmatprep.subr.bf16.mxu0 0
    %318 = vmatpush2.bf16.msra.mxu0 0
    %319 = vmatprep.mubr.bf16.mxu0 0
    %320 = vmatmul.mubr.bf16.gmra.mxu0 %v285
    %v321 = vpop.f32.mrf.mxu0
    %v322 = vadd.f32 0.0, %v321
    %v323 = vpop.f32.mrf.mxu0
    %v324 = vpop.f32.mrf.mxu0
    %v325 = vpop.f32.mrf.mxu0
    %326 = vdwg.mxu0
    %v328 = vrot.slane %v322, 1
    %v331 = vadd.f32 %v271, %v322
    %v332 = vadd.f32 %v272, %v328
    %v333 = vmul.f32 %v331, 0.5
    %v334 = vmul.f32 %v332, 0.5
    %v335 = vtanh.pop %v333
    %v336 = vtanh.pop %v334
    %v337 = vmul.f32 %v335, 0.5
    %v338 = vmul.f32 %v336, 0.5
    %v339 = vadd.f32 %v337, 0.5
    %v340 = vadd.f32 %v338, 0.5
    %v341 = vtanh.pop %v331
    %v342 = vtanh.pop %v332
    %v343 = vmul.f32 %v339, %v247
    %v344 = vmul.f32 %v340, %v248
    %347 = vrot.lane.b32.xlu0 %v341, 64
    %v348 = vpop.permute.xlu0 %347
    %349 = vrot.lane.b32.xlu0 %v342, 64
    %v350 = vpop.permute.xlu0 %349
    %v353 = vmul.f32 %v339, %v348
    %v354 = vmul.f32 %v340, %v350
    %357 = vrot.lane.b32.xlu0 %v353, 32
    %v358 = vpop.permute.xlu0 %357
    %359 = vrot.lane.b32.xlu0 %v354, 32
    %v360 = vpop.permute.xlu0 %359
    %v363 = vadd.f32 %v343, %v358
    %v364 = vadd.f32 %v344, %v360
    %v365 = vtanh.pop %v363
    %v366 = vtanh.pop %v364
    %369 = vrot.lane.b32.xlu0 %v365, 64
    %v370 = vpop.permute.xlu0 %369
    %371 = vrot.lane.b32.xlu0 %v366, 64
    %v372 = vpop.permute.xlu0 %371
    %v375 = vmul.f32 %v339, %v370
    %v376 = vmul.f32 %v340, %v372
    %379 = vrot.lane.b32.xlu0 %v375, 32
    %v380 = vpop.permute.xlu0 %379
    %381 = vrot.lane.b32.xlu0 %v376, 32
    %v382 = vpop.permute.xlu0 %381
    %385 = vst.msk [vmem:[#allocation4 + $0x2] sm:$0x1] %vm151, %v380
    %386 = vst.msk [vmem:[#allocation4 + $0xa] sm:$0x1] %vm151, %v382
    %v387 = vld [vmem:[%s0 + $0x3] sm:$0x1]
    %v388 = vld [vmem:[%s0 + $0xb] sm:$0x1]
    %v389 = vpack.c.bf16 %v375, %v375
    %v390 = vpack.c.bf16 %v376, %v376
    %v393 = vunpack.c.l.b16 %v389
    %v394 = vunpack.c.l.b16 %v390
    %v395 = vrot.slane %v394, 7
    %v396 = vsel %vm163, %v395, %v393
    %v397 = vpack.c.b16 %v396, %v396
    %398 = vrot.lane.b32.xlu0 %v397, 32
    %v399 = vpop.permute.xlu0 %398
    %v401 = vsel %vm41, %v399, 0
    %403 = vmatprep.subr.bf16.mxu0 0
    %404 = vmatpush1.bf16.msra.mxu0 0
    %405 = vmatprep.subr.bf16.mxu0 0
    %406 = vmatpush1.bf16.msra.mxu0 0
    %407 = vmatprep.subr.bf16.mxu0 0
    %408 = vmatpush1.bf16.msra.mxu0 0
    %409 = vmatprep.subr.bf16.mxu0 0
    %410 = vmatpush1.bf16.msra.mxu0 0
    %411 = vmatprep.subr.bf16.mxu0 0
    %412 = vmatpush1.bf16.msra.mxu0 0
    %413 = vmatprep.subr.bf16.mxu0 0
    %414 = vmatpush1.bf16.msra.mxu0 0
    %415 = vmatprep.subr.bf16.mxu0 0
    %416 = vmatpush1.bf16.msra.mxu0 %v38
    %417 = vmatprep.subr.bf16.mxu0 0
    %418 = vmatpush1.bf16.msra.mxu0 %v37
    %419 = vmatprep.subr.bf16.mxu0 0
    %420 = vmatpush2.bf16.msra.mxu0 0
    %421 = vmatprep.subr.bf16.mxu0 0
    %422 = vmatpush2.bf16.msra.mxu0 0
    %423 = vmatprep.subr.bf16.mxu0 0
    %424 = vmatpush2.bf16.msra.mxu0 0
    %425 = vmatprep.subr.bf16.mxu0 0
    %426 = vmatpush2.bf16.msra.mxu0 0
    %427 = vmatprep.subr.bf16.mxu0 0
    %428 = vmatpush2.bf16.msra.mxu0 0
    %429 = vmatprep.subr.bf16.mxu0 0
    %430 = vmatpush2.bf16.msra.mxu0 0
    %431 = vmatprep.subr.bf16.mxu0 0
    %432 = vmatpush2.bf16.msra.mxu0 0
    %433 = vmatprep.subr.bf16.mxu0 0
    %434 = vmatpush2.bf16.msra.mxu0 0
    %435 = vmatprep.mubr.bf16.mxu0 0
    %436 = vmatmul.mubr.bf16.gmra.mxu0 %v401
    %v437 = vpop.f32.mrf.mxu0
    %v438 = vadd.f32 0.0, %v437
    %v439 = vpop.f32.mrf.mxu0
    %v440 = vpop.f32.mrf.mxu0
    %v441 = vpop.f32.mrf.mxu0
    %442 = vdwg.mxu0
    %v444 = vrot.slane %v438, 1
    %v447 = vadd.f32 %v387, %v438
    %v448 = vadd.f32 %v388, %v444
    %v449 = vmul.f32 %v447, 0.5
    %v450 = vmul.f32 %v448, 0.5
    %v451 = vtanh.pop %v449
    %v452 = vtanh.pop %v450
    %v453 = vmul.f32 %v451, 0.5
    %v454 = vmul.f32 %v452, 0.5
    %v455 = vadd.f32 %v453, 0.5
    %v456 = vadd.f32 %v454, 0.5
    %v457 = vtanh.pop %v447
    %v458 = vtanh.pop %v448
    %v459 = vmul.f32 %v455, %v363
    %v460 = vmul.f32 %v456, %v364
    %463 = vrot.lane.b32.xlu0 %v457, 64
    %v464 = vpop.permute.xlu0 %463
    %465 = vrot.lane.b32.xlu0 %v458, 64
    %v466 = vpop.permute.xlu0 %465
    %v469 = vmul.f32 %v455, %v464
    %v470 = vmul.f32 %v456, %v466
    %473 = vrot.lane.b32.xlu0 %v469, 32
    %v474 = vpop.permute.xlu0 %473
    %475 = vrot.lane.b32.xlu0 %v470, 32
    %v476 = vpop.permute.xlu0 %475
    %v479 = vadd.f32 %v459, %v474
    %v480 = vadd.f32 %v460, %v476
    %v481 = vtanh.pop %v479
    %v482 = vtanh.pop %v480
    %485 = vrot.lane.b32.xlu0 %v481, 64
    %v486 = vpop.permute.xlu0 %485
    %487 = vrot.lane.b32.xlu0 %v482, 64
    %v488 = vpop.permute.xlu0 %487
    %v491 = vmul.f32 %v455, %v486
    %v492 = vmul.f32 %v456, %v488
    %495 = vrot.lane.b32.xlu0 %v491, 32
    %v496 = vpop.permute.xlu0 %495
    %497 = vrot.lane.b32.xlu0 %v492, 32
    %v498 = vpop.permute.xlu0 %497
    %501 = vst.msk [vmem:[#allocation4 + $0x3] sm:$0x1] %vm151, %v496
    %502 = vst.msk [vmem:[#allocation4 + $0xb] sm:$0x1] %vm151, %v498
    %v503 = vld [vmem:[%s0 + $0x4] sm:$0x1]
    %v504 = vld [vmem:[%s0 + $0xc] sm:$0x1]
    %v505 = vpack.c.bf16 %v491, %v491
    %v506 = vpack.c.bf16 %v492, %v492
    %v509 = vunpack.c.l.b16 %v505
    %v510 = vunpack.c.l.b16 %v506
    %v511 = vrot.slane %v510, 7
    %v512 = vsel %vm163, %v511, %v509
    %v513 = vpack.c.b16 %v512, %v512
    %514 = vrot.lane.b32.xlu0 %v513, 32
    %v515 = vpop.permute.xlu0 %514
    %v517 = vsel %vm41, %v515, 0
    %519 = vmatprep.subr.bf16.mxu0 0
    %520 = vmatpush1.bf16.msra.mxu0 0
    %521 = vmatprep.subr.bf16.mxu0 0
    %522 = vmatpush1.bf16.msra.mxu0 0
    %523 = vmatprep.subr.bf16.mxu0 0
    %524 = vmatpush1.bf16.msra.mxu0 0
    %525 = vmatprep.subr.bf16.mxu0 0
    %526 = vmatpush1.bf16.msra.mxu0 0
    %527 = vmatprep.subr.bf16.mxu0 0
    %528 = vmatpush1.bf16.msra.mxu0 0
    %529 = vmatprep.subr.bf16.mxu0 0
    %530 = vmatpush1.bf16.msra.mxu0 0
    %531 = vmatprep.subr.bf16.mxu0 0
    %532 = vmatpush1.bf16.msra.mxu0 %v38
    %533 = vmatprep.subr.bf16.mxu0 0
    %534 = vmatpush1.bf16.msra.mxu0 %v37
    %535 = vmatprep.subr.bf16.mxu0 0
    %536 = vmatpush2.bf16.msra.mxu0 0
    %537 = vmatprep.subr.bf16.mxu0 0
    %538 = vmatpush2.bf16.msra.mxu0 0
    %539 = vmatprep.subr.bf16.mxu0 0
    %540 = vmatpush2.bf16.msra.mxu0 0
    %541 = vmatprep.subr.bf16.mxu0 0
    %542 = vmatpush2.bf16.msra.mxu0 0
    %543 = vmatprep.subr.bf16.mxu0 0
    %544 = vmatpush2.bf16.msra.mxu0 0
    %545 = vmatprep.subr.bf16.mxu0 0
    %546 = vmatpush2.bf16.msra.mxu0 0
    %547 = vmatprep.subr.bf16.mxu0 0
    %548 = vmatpush2.bf16.msra.mxu0 0
    %549 = vmatprep.subr.bf16.mxu0 0
    %550 = vmatpush2.bf16.msra.mxu0 0
    %551 = vmatprep.mubr.bf16.mxu0 0
    %552 = vmatmul.mubr.bf16.gmra.mxu0 %v517
    %v553 = vpop.f32.mrf.mxu0
    %v554 = vadd.f32 0.0, %v553
    %v555 = vpop.f32.mrf.mxu0
    %v556 = vpop.f32.mrf.mxu0
    %v557 = vpop.f32.mrf.mxu0
    %558 = vdwg.mxu0
    %v560 = vrot.slane %v554, 1
    %v563 = vadd.f32 %v503, %v554
    %v564 = vadd.f32 %v504, %v560
    %v565 = vmul.f32 %v563, 0.5
    %v566 = vmul.f32 %v564, 0.5
    %v567 = vtanh.pop %v565
    %v568 = vtanh.pop %v566
    %v569 = vmul.f32 %v567, 0.5
    %v570 = vmul.f32 %v568, 0.5
    %v571 = vadd.f32 %v569, 0.5
    %v572 = vadd.f32 %v570, 0.5
    %v573 = vtanh.pop %v563
    %v574 = vtanh.pop %v564
    %v575 = vmul.f32 %v571, %v479
    %v576 = vmul.f32 %v572, %v480
    %579 = vrot.lane.b32.xlu0 %v573, 64
    %v580 = vpop.permute.xlu0 %579
    %581 = vrot.lane.b32.xlu0 %v574, 64
    %v582 = vpop.permute.xlu0 %581
    %v585 = vmul.f32 %v571, %v580
    %v586 = vmul.f32 %v572, %v582
    %589 = vrot.lane.b32.xlu0 %v585, 32
    %v590 = vpop.permute.xlu0 %589
    %591 = vrot.lane.b32.xlu0 %v586, 32
    %v592 = vpop.permute.xlu0 %591
    %v595 = vadd.f32 %v575, %v590
    %v596 = vadd.f32 %v576, %v592
    %v597 = vtanh.pop %v595
    %v598 = vtanh.pop %v596
    %601 = vrot.lane.b32.xlu0 %v597, 64
    %v602 = vpop.permute.xlu0 %601
    %603 = vrot.lane.b32.xlu0 %v598, 64
    %v604 = vpop.permute.xlu0 %603
    %v607 = vmul.f32 %v571, %v602
    %v608 = vmul.f32 %v572, %v604
    %611 = vrot.lane.b32.xlu0 %v607, 32
    %v612 = vpop.permute.xlu0 %611
    %613 = vrot.lane.b32.xlu0 %v608, 32
    %v614 = vpop.permute.xlu0 %613
    %617 = vst.msk [vmem:[#allocation4 + $0x4] sm:$0x1] %vm151, %v612
    %618 = vst.msk [vmem:[#allocation4 + $0xc] sm:$0x1] %vm151, %v614
    %v619 = vld [vmem:[%s0 + $0x5] sm:$0x1]
    %v620 = vld [vmem:[%s0 + $0xd] sm:$0x1]
    %v621 = vpack.c.bf16 %v607, %v607
    %v622 = vpack.c.bf16 %v608, %v608
    %v625 = vunpack.c.l.b16 %v621
    %v626 = vunpack.c.l.b16 %v622
    %v627 = vrot.slane %v626, 7
    %v628 = vsel %vm163, %v627, %v625
    %v629 = vpack.c.b16 %v628, %v628
    %630 = vrot.lane.b32.xlu0 %v629, 32
    %v631 = vpop.permute.xlu0 %630
    %v633 = vsel %vm41, %v631, 0
    %635 = vmatprep.subr.bf16.mxu0 0
    %636 = vmatpush1.bf16.msra.mxu0 0
    %637 = vmatprep.subr.bf16.mxu0 0
    %638 = vmatpush1.bf16.msra.mxu0 0
    %639 = vmatprep.subr.bf16.mxu0 0
    %640 = vmatpush1.bf16.msra.mxu0 0
    %641 = vmatprep.subr.bf16.mxu0 0
    %642 = vmatpush1.bf16.msra.mxu0 0
    %643 = vmatprep.subr.bf16.mxu0 0
    %644 = vmatpush1.bf16.msra.mxu0 0
    %645 = vmatprep.subr.bf16.mxu0 0
    %646 = vmatpush1.bf16.msra.mxu0 0
    %647 = vmatprep.subr.bf16.mxu0 0
    %648 = vmatpush1.bf16.msra.mxu0 %v38
    %649 = vmatprep.subr.bf16.mxu0 0
    %650 = vmatpush1.bf16.msra.mxu0 %v37
    %651 = vmatprep.subr.bf16.mxu0 0
    %652 = vmatpush2.bf16.msra.mxu0 0
    %653 = vmatprep.subr.bf16.mxu0 0
    %654 = vmatpush2.bf16.msra.mxu0 0
    %655 = vmatprep.subr.bf16.mxu0 0
    %656 = vmatpush2.bf16.msra.mxu0 0
    %657 = vmatprep.subr.bf16.mxu0 0
    %658 = vmatpush2.bf16.msra.mxu0 0
    %659 = vmatprep.subr.bf16.mxu0 0
    %660 = vmatpush2.bf16.msra.mxu0 0
    %661 = vmatprep.subr.bf16.mxu0 0
    %662 = vmatpush2.bf16.msra.mxu0 0
    %663 = vmatprep.subr.bf16.mxu0 0
    %664 = vmatpush2.bf16.msra.mxu0 0
    %665 = vmatprep.subr.bf16.mxu0 0
    %666 = vmatpush2.bf16.msra.mxu0 0
    %667 = vmatprep.mubr.bf16.mxu0 0
    %668 = vmatmul.mubr.bf16.gmra.mxu0 %v633
    %v669 = vpop.f32.mrf.mxu0
    %v670 = vadd.f32 0.0, %v669
    %v671 = vpop.f32.mrf.mxu0
    %v672 = vpop.f32.mrf.mxu0
    %v673 = vpop.f32.mrf.mxu0
    %674 = vdwg.mxu0
    %v676 = vrot.slane %v670, 1
    %v679 = vadd.f32 %v619, %v670
    %v680 = vadd.f32 %v620, %v676
    %v681 = vmul.f32 %v679, 0.5
    %v682 = vmul.f32 %v680, 0.5
    %v683 = vtanh.pop %v681
    %v684 = vtanh.pop %v682
    %v685 = vmul.f32 %v683, 0.5
    %v686 = vmul.f32 %v684, 0.5
    %v687 = vadd.f32 %v685, 0.5
    %v688 = vadd.f32 %v686, 0.5
    %v689 = vtanh.pop %v679
    %v690 = vtanh.pop %v680
    %v691 = vmul.f32 %v687, %v595
    %v692 = vmul.f32 %v688, %v596
    %695 = vrot.lane.b32.xlu0 %v689, 64
    %v696 = vpop.permute.xlu0 %695
    %697 = vrot.lane.b32.xlu0 %v690, 64
    %v698 = vpop.permute.xlu0 %697
    %v701 = vmul.f32 %v687, %v696
    %v702 = vmul.f32 %v688, %v698
    %705 = vrot.lane.b32.xlu0 %v701, 32
    %v706 = vpop.permute.xlu0 %705
    %707 = vrot.lane.b32.xlu0 %v702, 32
    %v708 = vpop.permute.xlu0 %707
    %v711 = vadd.f32 %v691, %v706
    %v712 = vadd.f32 %v692, %v708
    %v713 = vtanh.pop %v711
    %v714 = vtanh.pop %v712
    %717 = vrot.lane.b32.xlu0 %v713, 64
    %v718 = vpop.permute.xlu0 %717
    %719 = vrot.lane.b32.xlu0 %v714, 64
    %v720 = vpop.permute.xlu0 %719
    %v723 = vmul.f32 %v687, %v718
    %v724 = vmul.f32 %v688, %v720
    %727 = vrot.lane.b32.xlu0 %v723, 32
    %v728 = vpop.permute.xlu0 %727
    %729 = vrot.lane.b32.xlu0 %v724, 32
    %v730 = vpop.permute.xlu0 %729
    %733 = vst.msk [vmem:[#allocation4 + $0x5] sm:$0x1] %vm151, %v728
    %734 = vst.msk [vmem:[#allocation4 + $0xd] sm:$0x1] %vm151, %v730
    %v735 = vld [vmem:[%s0 + $0x6] sm:$0x1]
    %v736 = vld [vmem:[%s0 + $0xe] sm:$0x1]
    %v737 = vpack.c.bf16 %v723, %v723
    %v738 = vpack.c.bf16 %v724, %v724
    %v741 = vunpack.c.l.b16 %v737
    %v742 = vunpack.c.l.b16 %v738
    %v743 = vrot.slane %v742, 7
    %v744 = vsel %vm163, %v743, %v741
    %v745 = vpack.c.b16 %v744, %v744
    %746 = vrot.lane.b32.xlu0 %v745, 32
    %v747 = vpop.permute.xlu0 %746
    %v749 = vsel %vm41, %v747, 0
    %751 = vmatprep.subr.bf16.mxu0 0
    %752 = vmatpush1.bf16.msra.mxu0 0
    %753 = vmatprep.subr.bf16.mxu0 0
    %754 = vmatpush1.bf16.msra.mxu0 0
    %755 = vmatprep.subr.bf16.mxu0 0
    %756 = vmatpush1.bf16.msra.mxu0 0
    %757 = vmatprep.subr.bf16.mxu0 0
    %758 = vmatpush1.bf16.msra.mxu0 0
    %759 = vmatprep.subr.bf16.mxu0 0
    %760 = vmatpush1.bf16.msra.mxu0 0
    %761 = vmatprep.subr.bf16.mxu0 0
    %762 = vmatpush1.bf16.msra.mxu0 0
    %763 = vmatprep.subr.bf16.mxu0 0
    %764 = vmatpush1.bf16.msra.mxu0 %v38
    %765 = vmatprep.subr.bf16.mxu0 0
    %766 = vmatpush1.bf16.msra.mxu0 %v37
    %767 = vmatprep.subr.bf16.mxu0 0
    %768 = vmatpush2.bf16.msra.mxu0 0
    %769 = vmatprep.subr.bf16.mxu0 0
    %770 = vmatpush2.bf16.msra.mxu0 0
    %771 = vmatprep.subr.bf16.mxu0 0
    %772 = vmatpush2.bf16.msra.mxu0 0
    %773 = vmatprep.subr.bf16.mxu0 0
    %774 = vmatpush2.bf16.msra.mxu0 0
    %775 = vmatprep.subr.bf16.mxu0 0
    %776 = vmatpush2.bf16.msra.mxu0 0
    %777 = vmatprep.subr.bf16.mxu0 0
    %778 = vmatpush2.bf16.msra.mxu0 0
    %779 = vmatprep.subr.bf16.mxu0 0
    %780 = vmatpush2.bf16.msra.mxu0 0
    %781 = vmatprep.subr.bf16.mxu0 0
    %782 = vmatpush2.bf16.msra.mxu0 0
    %783 = vmatprep.mubr.bf16.mxu0 0
    %784 = vmatmul.mubr.bf16.gmra.mxu0 %v749
    %v785 = vpop.f32.mrf.mxu0
    %v786 = vadd.f32 0.0, %v785
    %v787 = vpop.f32.mrf.mxu0
    %v788 = vpop.f32.mrf.mxu0
    %v789 = vpop.f32.mrf.mxu0
    %790 = vdwg.mxu0
    %v792 = vrot.slane %v786, 1
    %v795 = vadd.f32 %v735, %v786
    %v796 = vadd.f32 %v736, %v792
    %v797 = vmul.f32 %v795, 0.5
    %v798 = vmul.f32 %v796, 0.5
    %v799 = vtanh.pop %v797
    %v800 = vtanh.pop %v798
    %v801 = vmul.f32 %v799, 0.5
    %v802 = vmul.f32 %v800, 0.5
    %v803 = vadd.f32 %v801, 0.5
    %v804 = vadd.f32 %v802, 0.5
    %v805 = vtanh.pop %v795
    %v806 = vtanh.pop %v796
    %v807 = vmul.f32 %v803, %v711
    %v808 = vmul.f32 %v804, %v712
    %811 = vrot.lane.b32.xlu0 %v805, 64
    %v812 = vpop.permute.xlu0 %811
    %813 = vrot.lane.b32.xlu0 %v806, 64
    %v814 = vpop.permute.xlu0 %813
    %v817 = vmul.f32 %v803, %v812
    %v818 = vmul.f32 %v804, %v814
    %821 = vrot.lane.b32.xlu0 %v817, 32
    %v822 = vpop.permute.xlu0 %821
    %823 = vrot.lane.b32.xlu0 %v818, 32
    %v824 = vpop.permute.xlu0 %823
    %v827 = vadd.f32 %v807, %v822
    %v828 = vadd.f32 %v808, %v824
    %v829 = vtanh.pop %v827
    %v830 = vtanh.pop %v828
    %833 = vrot.lane.b32.xlu0 %v829, 64
    %v834 = vpop.permute.xlu0 %833
    %835 = vrot.lane.b32.xlu0 %v830, 64
    %v836 = vpop.permute.xlu0 %835
    %v839 = vmul.f32 %v803, %v834
    %v840 = vmul.f32 %v804, %v836
    %843 = vrot.lane.b32.xlu0 %v839, 32
    %v844 = vpop.permute.xlu0 %843
    %845 = vrot.lane.b32.xlu0 %v840, 32
    %v846 = vpop.permute.xlu0 %845
    %849 = vst.msk [vmem:[#allocation4 + $0x6] sm:$0x1] %vm151, %v844
    %850 = vst.msk [vmem:[#allocation4 + $0xe] sm:$0x1] %vm151, %v846
    %v851 = vld [vmem:[%s0 + $0x7] sm:$0x1]
    %v852 = vld [vmem:[%s0 + $0xf] sm:$0x1]
    %v853 = vpack.c.bf16 %v839, %v839
    %v854 = vpack.c.bf16 %v840, %v840
    %v857 = vunpack.c.l.b16 %v853
    %v858 = vunpack.c.l.b16 %v854
    %v859 = vrot.slane %v858, 7
    %v860 = vsel %vm163, %v859, %v857
    %v861 = vpack.c.b16 %v860, %v860
    %862 = vrot.lane.b32.xlu0 %v861, 32
    %v863 = vpop.permute.xlu0 %862
    %v865 = vsel %vm41, %v863, 0
    %867 = vmatprep.subr.bf16.mxu0 0
    %868 = vmatpush1.bf16.msra.mxu0 0
    %869 = vmatprep.subr.bf16.mxu0 0
    %870 = vmatpush1.bf16.msra.mxu0 0
    %871 = vmatprep.subr.bf16.mxu0 0
    %872 = vmatpush1.bf16.msra.mxu0 0
    %873 = vmatprep.subr.bf16.mxu0 0
    %874 = vmatpush1.bf16.msra.mxu0 0
    %875 = vmatprep.subr.bf16.mxu0 0
    %876 = vmatpush1.bf16.msra.mxu0 0
    %877 = vmatprep.subr.bf16.mxu0 0
    %878 = vmatpush1.bf16.msra.mxu0 0
    %879 = vmatprep.subr.bf16.mxu0 0
    %880 = vmatpush1.bf16.msra.mxu0 %v38
    %881 = vmatprep.subr.bf16.mxu0 0
    %882 = vmatpush1.bf16.msra.mxu0 %v37
    %883 = vmatprep.subr.bf16.mxu0 0
    %884 = vmatpush2.bf16.msra.mxu0 0
    %885 = vmatprep.subr.bf16.mxu0 0
    %886 = vmatpush2.bf16.msra.mxu0 0
    %887 = vmatprep.subr.bf16.mxu0 0
    %888 = vmatpush2.bf16.msra.mxu0 0
    %889 = vmatprep.subr.bf16.mxu0 0
    %890 = vmatpush2.bf16.msra.mxu0 0
    %891 = vmatprep.subr.bf16.mxu0 0
    %892 = vmatpush2.bf16.msra.mxu0 0
    %893 = vmatprep.subr.bf16.mxu0 0
    %894 = vmatpush2.bf16.msra.mxu0 0
    %895 = vmatprep.subr.bf16.mxu0 0
    %896 = vmatpush2.bf16.msra.mxu0 0
    %897 = vmatprep.subr.bf16.mxu0 0
    %898 = vmatpush2.bf16.msra.mxu0 0
    %899 = vmatprep.mubr.bf16.mxu0 0
    %900 = vmatmul.mubr.bf16.gmra.mxu0 %v865
    %v901 = vpop.f32.mrf.mxu0
    %v902 = vadd.f32 0.0, %v901
    %v903 = vpop.f32.mrf.mxu0
    %v904 = vpop.f32.mrf.mxu0
    %v905 = vpop.f32.mrf.mxu0
    %906 = vdwg.mxu0
    %v908 = vrot.slane %v902, 1
    %v911 = vadd.f32 %v851, %v902
    %v912 = vadd.f32 %v852, %v908
    %v913 = vmul.f32 %v911, 0.5
    %v914 = vmul.f32 %v912, 0.5
    %v915 = vtanh.pop %v913
    %v916 = vtanh.pop %v914
    %v917 = vmul.f32 %v915, 0.5
    %v918 = vmul.f32 %v916, 0.5
    %v919 = vadd.f32 %v917, 0.5
    %v920 = vadd.f32 %v918, 0.5
    %v921 = vtanh.pop %v911
    %v922 = vtanh.pop %v912
    %v923 = vmul.f32 %v919, %v827
    %v924 = vmul.f32 %v920, %v828
    %927 = vrot.lane.b32.xlu0 %v921, 64
    %v928 = vpop.permute.xlu0 %927
    %929 = vrot.lane.b32.xlu0 %v922, 64
    %v930 = vpop.permute.xlu0 %929
    %v933 = vmul.f32 %v919, %v928
    %v934 = vmul.f32 %v920, %v930
    %937 = vrot.lane.b32.xlu0 %v933, 32
    %v938 = vpop.permute.xlu0 %937
    %939 = vrot.lane.b32.xlu0 %v934, 32
    %v940 = vpop.permute.xlu0 %939
    %v943 = vadd.f32 %v923, %v938
    %v944 = vadd.f32 %v924, %v940
    %v945 = vtanh.pop %v943
    %v946 = vtanh.pop %v944
    %949 = vrot.lane.b32.xlu0 %v945, 64
    %v950 = vpop.permute.xlu0 %949
    %951 = vrot.lane.b32.xlu0 %v946, 64
    %v952 = vpop.permute.xlu0 %951
    %v955 = vmul.f32 %v919, %v950
    %v956 = vmul.f32 %v920, %v952
    %959 = vrot.lane.b32.xlu0 %v955, 32
    %v960 = vpop.permute.xlu0 %959
    %961 = vrot.lane.b32.xlu0 %v956, 32
    %v962 = vpop.permute.xlu0 %961
    %965 = vst.msk [vmem:[#allocation4 + $0x7] sm:$0x1] %vm151, %v960
    %966 = vst.msk [vmem:[#allocation4 + $0xf] sm:$0x1] %vm151, %v962
    %v967 = vrot.slane %v956, 7
    %v968 = vsel %vm163, %v967, %v955
    %969 = vrot.lane.b32.xlu0 %v968, 32
    %v970 = vpop.permute.xlu0 %969
    %vm972 = vcmask 254976
    %973 = vst.msk [vmem:[#allocation2] sm:$0x3] %vm972, %v970
    %v976 = vrot.slane %v944, 7
    %v977 = vsel %vm163, %v976, %v943
    %978 = vrot.lane.b32.xlu0 %v977, 96
    %v979 = vpop.permute.xlu0 %978
    %981 = vst.msk [vmem:[#allocation3] sm:$0x3] %vm972, %v979
    // Predicated region
    $region14: #{modeling_forward.1} parent=1 // pred_check
      _
    $region15: #{modeling_forward.1} parent=1 // pred_check_branch
      %983 = sbr.rel (0) target = $region17
    $region16: #{modeling_forward.1} parent=1 // pred_region
      %s985 = ssub.s32 256, 256
      %986 = vsyncadd [#allocation5], %s985
      %s987 = sshll.u32 [#allocation4], 4
      %s988 = int_to_ptr.vmem [resolvable:$true] %s987
      %993 = dma.vmem_to_hbm [thread:$0]  %s988, 256, %s2, [#allocation5], 128, 128, 8
    $region17: #{modeling_forward.1} parent=1 // pred_fallthru
      _
    // Predicated region
    $region18: #{modeling_forward.1} parent=1 // pred_check
      _
    $region19: #{modeling_forward.1} parent=1 // pred_check_branch
      %995 = sbr.rel (0) target = $region21
    $region20: #{modeling_forward.1} parent=1 // pred_region
      %996 = dma.done [#allocation5], 256
    $region21: #{modeling_forward.1} parent=1 // pred_fallthru
      _
    %997 = vsyncpa [#allocation5], 1

</llo_original>
